<compile_context>
chip_gen: v7x
topology: tpu7x:2x2x1
jax: 0.10.0
libtpu: 0.0.40
codegen_flags: <defaults>
</compile_context>

<pallas_src>
import jax
import jax.numpy as jnp
from jax.experimental import pallas as pl
from jax.experimental.pallas import tpu as pltpu

LANE = 128
MAX_TILE_LANES = 64 * 1024                 # hard cap on lanes per block
X_BLOCK_BYTES_BUDGET = 6 * 1024 * 1024     # keep the x block around <=6 MiB


def _make_ce_kernel(hw: int, tile_lanes: int, needs_mask: bool):
    """Fused softmax + cross-entropy over one (batch, lane-tile) block."""

    def kernel(x_ref, t_ref, out_ref, acc_ref):
        j = pl.program_id(1)
        nj = pl.num_programs(1)

        @pl.when(j == 0)
        def _():
            acc_ref[...] = jnp.zeros_like(acc_ref)

        x = x_ref[...].astype(jnp.float32)        # (1, C, T)
        t = t_ref[...]                            # (1, 1, T) int32 class indices

        # softmax over the channel axis (numerically stable).
        m1 = jnp.max(x, axis=1, keepdims=True)
        e1 = jnp.exp(x - m1)
        s1 = jnp.sum(e1, axis=1, keepdims=True)
        inv_s1 = 1.0 / s1                         # 1 divide per lane, then C muls
        p = e1 * inv_s1                           # (1, C, T), values in (0, 1]

        # CrossEntropyLoss on probabilities p with integer targets:
        #   loss = logsumexp_c(p) - p[target]
        # p is bounded in (0, 1] so exp(p) cannot overflow -> skip the max-shift.
        lse = jnp.log(jnp.sum(jnp.exp(p), axis=1, keepdims=True))

        c_idx = jax.lax.broadcasted_iota(jnp.int32, p.shape, 1)
        p_t = jnp.sum(jnp.where(c_idx == t, p, 0.0), axis=1, keepdims=True)

        loss = lse - p_t                          # (1, 1, T)

        if needs_mask:
            # Only the final tile along H*W can be partial -> mask just there.
            @pl.when(j == nj - 1)
            def _():
                col = jax.lax.broadcasted_iota(jnp.int32, loss.shape, 2)
                valid = (j * tile_lanes + col) < hw
                acc_ref[...] += jnp.where(valid, loss, 0.0)

            @pl.when(j != nj - 1)
            def _():
                acc_ref[...] += loss
        else:
            acc_ref[...] += loss

        # Epilogue: single cross-lane reduce, write this batch's partial sum.
        @pl.when(j == nj - 1)
        def _():
            out_ref[...] = jnp.sum(acc_ref[...], keepdims=True)   # (1, 1, 1)

    return kernel


@jax.jit
def ce_loss(inp: jax.Array, target: jax.Array) -> jax.Array:
    """Forward pass of CELoss.

    inp:    (N, C, H, W) float logits
    target: (N, H, W) or (N, 1, H, W) integer class indices in [0, C)
    returns scalar float32 loss.
    """
    assert inp.ndim == 4, inp.shape
    N, C, H, W = inp.shape
    if target.ndim == 4 and target.shape[1] == 1:
        target = target[:, 0]
    assert target.shape == (N, H, W), (inp.shape, target.shape)

    HW = H * W
    # Metadata-only reshapes of contiguous NCHW arrays -- no HBM copies here.
    x3 = inp.reshape(N, C, HW)
    t3 = target.astype(jnp.int32).reshape(N, 1, HW)

    # Lane-tile size: as large as fits the x-block budget, multiple of 128.
    itemsize = jnp.dtype(inp.dtype).itemsize
    lanes_cap = (X_BLOCK_BYTES_BUDGET // (itemsize * C)) // LANE * LANE
    lanes_cap = max(LANE, min(lanes_cap, MAX_TILE_LANES))
    if HW <= lanes_cap:
        tile_lanes = HW           # single full-extent tile along H*W -> no mask
        n_tiles = 1
        needs_mask = False
    else:
        tile_lanes = lanes_cap
        n_tiles = pl.cdiv(HW, tile_lanes)
        needs_mask = (HW % tile_lanes) != 0

    partials = pl.pallas_call(
        _make_ce_kernel(HW, tile_lanes, needs_mask),
        out_shape=jax.ShapeDtypeStruct((N, 1, 1), jnp.float32),
        grid_spec=pltpu.PrefetchScalarGridSpec(
            num_scalar_prefetch=0,
            grid=(N, n_tiles),
            in_specs=[
                pl.BlockSpec((1, C, tile_lanes), lambda n, j: (n, 0, j)),
                pl.BlockSpec((1, 1, tile_lanes), lambda n, j: (n, 0, j)),
            ],
            out_specs=pl.BlockSpec((1, 1, 1), lambda n, j: (n, 0, 0)),
            scratch_shapes=[pltpu.VMEM((1, 1, tile_lanes), jnp.float32)],
        ),
        compiler_params=pltpu.CompilerParams(
            dimension_semantics=("parallel", "arbitrary"),
        ),
    )(x3, t3)

    return jnp.sum(partials) / jnp.float32(N * HW)


def _reference_loss(inp, target):
    """Plain-JAX reference mirroring the PyTorch module."""
    if target.ndim == 4 and target.shape[1] == 1:
        target = target[:, 0]
    p = jax.nn.softmax(inp.astype(jnp.float32), axis=1)          # F.softmax(input, 1)
    lse = jax.nn.logsumexp(p, axis=1)                            # log_softmax inside CE
    p_t = jnp.take_along_axis(p, target[:, None].astype(jnp.int32), axis=1)[:, 0]
    return jnp.mean(lse - p_t)


if __name__ == "__main__":
    key = jax.random.PRNGKey(0)
    k1, k2 = jax.random.split(key)

    N, C, H, W = 2, 4, 16, 16
    x = jax.random.normal(k1, (N, C, H, W), dtype=jnp.float32)
    target = jax.random.randint(k2, (N, H, W), 0, C, dtype=jnp.int32)

    loss = ce_loss(x, target)
    loss = jax.block_until_ready(loss)

    ref = jax.block_until_ready(_reference_loss(x, target))
    assert jnp.allclose(loss, ref, rtol=1e-5, atol=1e-5), (loss, ref)

    print("KERNEL_OK")
</pallas_src>

<mosaic_0001>
module attributes {stable_mosaic.version = 11 : i64} {
  func.func @kernel(%arg0: i32, %arg1: i32, %arg2: memref<1x4x256xf32, #tpu.memory_space<vmem>>, %arg3: memref<1x1x256xi32, #tpu.memory_space<vmem>>, %arg4: memref<1x1x1xf32, #tpu.memory_space<vmem>>, %arg5: memref<1x1x256xf32, #tpu.memory_space<vmem>>) attributes {dimension_semantics = [#tpu.dimension_semantics<parallel>, #tpu.dimension_semantics<arbitrary>], iteration_bounds = array<i64: 2, 1>, scalar_prefetch = 0 : i64, scratch_operands = 1 : i64, tpu.core_type = #tpu.core_type<tc>, window_params = [{transform_indices = @transform_0, window_bounds = array<i64: 1, 4, 256>}, {transform_indices = @transform_1, window_bounds = array<i64: 1, 1, 256>}, {transform_indices = @transform_2, window_bounds = array<i64: 1, 1, 1>}]} {
    %c0_i32 = arith.constant 0 : i32
    %0 = arith.cmpi eq, %arg1, %c0_i32 : i32
    %1 = arith.extui %0 : i1 to i32
    %c0_i32_0 = arith.constant 0 : i32
    %2 = arith.cmpi ne, %1, %c0_i32_0 : i32
    scf.if %2 {
      %cst_19 = arith.constant 0.000000e+00 : f32
      %34 = vector.broadcast %cst_19 : f32 to vector<1x1x256xf32>
      %c0_20 = arith.constant 0 : index
      %c0_21 = arith.constant 0 : index
      %c0_22 = arith.constant 0 : index
      %35 = vector.load %arg5[%c0_20, %c0_21, %c0_22] : memref<1x1x256xf32, #tpu.memory_space<vmem>>, vector<1x1x256xf32>
      tpu.vector_store %arg5[%c0_20, %c0_21, %c0_22], %34 {strides = array<i32>} : memref<1x1x256xf32, #tpu.memory_space<vmem>>, vector<1x1x256xf32>,
    } else {
    }
    %c0 = arith.constant 0 : index
    %c0_1 = arith.constant 0 : index
    %c0_2 = arith.constant 0 : index
    %3 = vector.load %arg2[%c0, %c0_1, %c0_2] : memref<1x4x256xf32, #tpu.memory_space<vmem>>, vector<1x4x256xf32>
    %c0_3 = arith.constant 0 : index
    %c0_4 = arith.constant 0 : index
    %c0_5 = arith.constant 0 : index
    %4 = vector.load %arg3[%c0_3, %c0_4, %c0_5] : memref<1x1x256xi32, #tpu.memory_space<vmem>>, vector<1x1x256xi32>
    %cst = arith.constant dense<0xFF800000> : vector<1x256xf32>
    %5 = vector.multi_reduction <maximumf>, %3, %cst [1] : vector<1x4x256xf32> to vector<1x256xf32>
    %6 = vector.shape_cast %5 : vector<1x256xf32> to vector<1x1x256xf32>
    %7 = vector.broadcast %6 : vector<1x1x256xf32> to vector<1x4x256xf32>
    %8 = arith.subf %3, %7 : vector<1x4x256xf32>
    %9 = math.exp %8 : vector<1x4x256xf32>
    %cst_6 = arith.constant dense<0.000000e+00> : vector<1x256xf32>
    %10 = vector.multi_reduction <add>, %9, %cst_6 [1] : vector<1x4x256xf32> to vector<1x256xf32>
    %11 = vector.shape_cast %10 : vector<1x256xf32> to vector<1x1x256xf32>
    %cst_7 = arith.constant 1.000000e+00 : f32
    %12 = vector.broadcast %cst_7 : f32 to vector<1x1x256xf32>
    %13 = arith.divf %12, %11 : vector<1x1x256xf32>
    %14 = vector.broadcast %13 : vector<1x1x256xf32> to vector<1x4x256xf32>
    %15 = arith.mulf %9, %14 : vector<1x4x256xf32>
    %16 = math.exp %15 : vector<1x4x256xf32>
    %cst_8 = arith.constant dense<0.000000e+00> : vector<1x256xf32>
    %17 = vector.multi_reduction <add>, %16, %cst_8 [1] : vector<1x4x256xf32> to vector<1x256xf32>
    %18 = vector.shape_cast %17 : vector<1x256xf32> to vector<1x1x256xf32>
    %19 = math.log %18 : vector<1x1x256xf32>
    %20 = tpu.iota {dimensions = array<i32: 1>} : vector<1x4x256xi32>
    %21 = vector.broadcast %4 : vector<1x1x256xi32> to vector<1x4x256xi32>
    %22 = arith.cmpi eq, %20, %21 : vector<1x4x256xi32>
    %cst_9 = arith.constant 0.000000e+00 : f32
    %23 = vector.broadcast %cst_9 : f32 to vector<1x4x256xf32>
    %24 = arith.select %22, %15, %23 : vector<1x4x256xi1>, vector<1x4x256xf32>
    %cst_10 = arith.constant dense<0.000000e+00> : vector<1x256xf32>
    %25 = vector.multi_reduction <add>, %24, %cst_10 [1] : vector<1x4x256xf32> to vector<1x256xf32>
    %26 = vector.shape_cast %25 : vector<1x256xf32> to vector<1x1x256xf32>
    %27 = arith.subf %19, %26 : vector<1x1x256xf32>
    %c0_11 = arith.constant 0 : index
    %c0_12 = arith.constant 0 : index
    %c0_13 = arith.constant 0 : index
    %28 = vector.load %arg5[%c0_11, %c0_12, %c0_13] : memref<1x1x256xf32, #tpu.memory_space<vmem>>, vector<1x1x256xf32>
    %29 = arith.addf %28, %27 : vector<1x1x256xf32>
    %c0_14 = arith.constant 0 : index
    %c0_15 = arith.constant 0 : index
    %c0_16 = arith.constant 0 : index
    %30 = vector.load %arg5[%c0_14, %c0_15, %c0_16] : memref<1x1x256xf32, #tpu.memory_space<vmem>>, vector<1x1x256xf32>
    tpu.vector_store %arg5[%c0_14, %c0_15, %c0_16], %29 {strides = array<i32>} : memref<1x1x256xf32, #tpu.memory_space<vmem>>, vector<1x1x256xf32>,
    %c0_i32_17 = arith.constant 0 : i32
    %31 = arith.cmpi eq, %arg1, %c0_i32_17 : i32
    %32 = arith.extui %31 : i1 to i32
    %c0_i32_18 = arith.constant 0 : i32
    %33 = arith.cmpi ne, %32, %c0_i32_18 : i32
    scf.if %33 {
      %c0_19 = arith.constant 0 : index
      %c0_20 = arith.constant 0 : index
      %c0_21 = arith.constant 0 : index
      %34 = vector.load %arg5[%c0_19, %c0_20, %c0_21] : memref<1x1x256xf32, #tpu.memory_space<vmem>>, vector<1x1x256xf32>
      %35 = vector.shape_cast %34 : vector<1x1x256xf32> to vector<1x1x1x256xf32>
      %cst_22 = arith.constant dense<0.000000e+00> : vector<1xf32>
      %36 = vector.multi_reduction <add>, %35, %cst_22 [1, 2, 3] : vector<1x1x1x256xf32> to vector<1xf32>
      %37 = vector.shape_cast %36 : vector<1xf32> to vector<1x1x1x1xf32>
      %38 = vector.extract %37[0, 0, 0, 0] : f32 from vector<1x1x1x1xf32>
      %39 = vector.broadcast %38 : f32 to vector<1x1x1xf32>
      %c0_23 = arith.constant 0 : index
      %c0_24 = arith.constant 0 : index
      %c0_25 = arith.constant 0 : index
      %40 = vector.load %arg4[%c0_23, %c0_24, %c0_25] : memref<1x1x1xf32, #tpu.memory_space<vmem>>, vector<1x1x1xf32>
      tpu.vector_store %arg4[%c0_23, %c0_24, %c0_25], %39 {strides = array<i32>} : memref<1x1x1xf32, #tpu.memory_space<vmem>>, vector<1x1x1xf32>,
    } else {
    }
    return
  }
  func.func @transform_0(%arg0: i32, %arg1: i32) -> (i32, i32, i32) {
    %c0_i32 = arith.constant 0 : i32
    %c0_i32_0 = arith.constant 0 : i32
    return %arg0, %c0_i32, %arg1 : i32, i32, i32
  }
  func.func @transform_1(%arg0: i32, %arg1: i32) -> (i32, i32, i32) {
    %c0_i32 = arith.constant 0 : i32
    %c0_i32_0 = arith.constant 0 : i32
    return %arg0, %c0_i32, %arg1 : i32, i32, i32
  }
  func.func @transform_2(%arg0: i32, %arg1: i32) -> (i32, i32, i32) {
    %c0_i32 = arith.constant 0 : i32
    %c0_i32_0 = arith.constant 0 : i32
    %c0_i32_1 = arith.constant 0 : i32
    return %arg0, %c0_i32, %c0_i32_0 : i32, i32, i32
  }
}

</mosaic_0001>

<llo_original>
// kernel: ce_loss.1
$region0: #{ce_loss.1}
  #allocation0 [shape = 'u32[]', space=smem, size = 0x4, offset = 0x4, fixed_abs, tag = 'smem constant byte address 0x4 - core index']
  #allocation1 [shape = 'u32[144,128]{1,0:T(1,128)}', space=vmem, size = 0x12000, scoped, tag = 'internal scratch']
  #allocation2 [shape = 'f32[1,1,256]{2,1,0:T(1,128)}', space=vmem, size = 0x400, scoped, tag = 'scratch operand']
  %s0 = inlined_call_operand.vmem [shape: f32[2,4,256], index: 0, kind: input, shape index: {}]
  %s1 = inlined_call_operand.vmem [shape: s32[2,1,256], index: 1, kind: input, shape index: {}]
  %s2 = inlined_call_operand.vmem [shape: f32[2,1,1], index: 2, kind: output, shape index: {}]
  %s3 = sld [smem:[#allocation0]]
  $region49: #{ce_loss.1} parent=0
    _
  %s5 = ssub.s32 1, %s3
  %s6 = scalar_select 0, %s5, %s3
  loop: start=0, step=1, limit=4
  $region2: #{ce_loss.1} parent=0 // loop_pre_header
    _
  $region3: #{ce_loss.1} parent=0 // loop_header
    %s8 = sphi 0, %s12
    %p9 = scmp.ge.s32.totalorder %s8, 4
    %s15 = sphi 0, %s27
    %s16 = sphi 0, %s23
    %s17 = sphi 0, %s15
    %s18 = sphi 0, %s16
    %s19 = sphi 0, %s17
    %s20 = sphi 0, %s18
    %s32 = sphi 0, %s34
    %s35 = sphi 0, %s32
    %s36 = sphi 0, %s35
    %s52 = sphi 0, %s36
    %s60 = sphi 0, %s62
    %s63 = sphi 0, %s60
    %s64 = sphi 0, %s63
    %s80 = sphi 0, %s64
    %s86 = sphi 0, %s88
    %s89 = sphi 0, %s86
    %s90 = sphi 0, %s89
    %s106 = sphi 0, %s90
  $region4: #{ce_loss.1} parent=0 // loop_header_branch
    %11 = sbr.rel (%p9) target = $region8
  $region5: #{ce_loss.1} parent=0 // loop_body
    %s13 = ssub.s32 %s8, 1
    %s14 = ssub.s32 %s8, 2
    %s21 = sadd.s32 1, %s16
    %p22 = scmp.ge.s32.totalorder %s21, 1
    %s23 = scalar_select %p22, 0, %s21
    %s24 = sadd.s32 1, %s15
    %s25 = scalar_select %p22, %s24, %s15
    %p26 = scmp.ge.s32.totalorder %s25, 2
    %s27 = scalar_select %p26, 0, %s25
    %s28 = ssub.s32 %s15, %s27
    %s29 = ssub.s32 %s16, %s23
    %s30 = sor.u32 %s28, %s29
    %p31 = scmp.eq.s32.totalorder %s30, 0
    %s33 = sadd.s32 %s32, 1
    %s34 = scalar_select %p31, %s32, %s33
    %p37 = pneg %p31
    %p38 = scmp.eq.s32.totalorder %s8, 1
    %p39 = por %p37, %p38
    %p40 = scmp.ne.s32.totalorder %s32, %s35
    %p41 = scmp.eq.s32.totalorder %s8, 0
    %p42 = por %p40, %p41
    %p43 = scmp.ne.s32.totalorder %s32, %s35
    %p44 = scmp.eq.s32.totalorder %s13, 1
    %p45 = por %p43, %p44
    %p46 = scmp.ne.s32.totalorder %s35, %s36
    %p47 = scmp.eq.s32.totalorder %s13, 0
    %p48 = por %p46, %p47
    %p49 = scmp.ne.s32.totalorder %s35, %s36
    %p50 = scmp.eq.s32.totalorder %s14, 1
    %p51 = por %p49, %p50
    %p53 = scmp.ne.s32.totalorder %s36, %s52
    %p54 = scmp.eq.s32.totalorder %s14, 0
    %p55 = por %p53, %p54
    %s56 = ssub.s32 %s15, %s27
    %s57 = ssub.s32 %s16, %s23
    %s58 = sor.u32 %s56, %s57
    %p59 = scmp.eq.s32.totalorder %s58, 0
    %s61 = sadd.s32 %s60, 1
    %s62 = scalar_select %p59, %s60, %s61
    %p65 = pneg %p59
    %p66 = scmp.eq.s32.totalorder %s8, 1
    %p67 = por %p65, %p66
    %p68 = scmp.ne.s32.totalorder %s60, %s63
    %p69 = scmp.eq.s32.totalorder %s8, 0
    %p70 = por %p68, %p69
    %p71 = scmp.ne.s32.totalorder %s60, %s63
    %p72 = scmp.eq.s32.totalorder %s13, 1
    %p73 = por %p71, %p72
    %p74 = scmp.ne.s32.totalorder %s63, %s64
    %p75 = scmp.eq.s32.totalorder %s13, 0
    %p76 = por %p74, %p75
    %p77 = scmp.ne.s32.totalorder %s63, %s64
    %p78 = scmp.eq.s32.totalorder %s14, 1
    %p79 = por %p77, %p78
    %p81 = scmp.ne.s32.totalorder %s64, %s80
    %p82 = scmp.eq.s32.totalorder %s14, 0
    %p83 = por %p81, %p82
    %s84 = ssub.s32 %s15, %s27
    %p85 = scmp.eq.s32.totalorder %s84, 0
    %s87 = sadd.s32 %s86, 1
    %s88 = scalar_select %p85, %s86, %s87
    %p91 = pneg %p85
    %p92 = scmp.eq.s32.totalorder %s8, 1
    %p93 = por %p91, %p92
    %p94 = scmp.ne.s32.totalorder %s86, %s89
    %p95 = scmp.eq.s32.totalorder %s8, 0
    %p96 = por %p94, %p95
    %p97 = scmp.ne.s32.totalorder %s86, %s89
    %p98 = scmp.eq.s32.totalorder %s13, 1
    %p99 = por %p97, %p98
    %p100 = scmp.ne.s32.totalorder %s89, %s90
    %p101 = scmp.eq.s32.totalorder %s13, 0
    %p102 = por %p100, %p101
    %p103 = scmp.ne.s32.totalorder %s89, %s90
    %p104 = scmp.eq.s32.totalorder %s14, 1
    %p105 = por %p103, %p104
    %p107 = scmp.ne.s32.totalorder %s90, %s106
    %p108 = scmp.eq.s32.totalorder %s14, 0
    %p109 = por %p107, %p108
    %p110 = scmp.le.s32.totalorder 1, %s8
    %p111 = scmp.lt.s32.totalorder %s8, 3
    %p112 = pnand %p110, %p111
    %p113 = pneg %p112
    // Predicated region
    $region9: #{ce_loss.1} parent=5 // pred_check
      _
    $region10: #{ce_loss.1} parent=5 // pred_check_branch
      %115 = sbr.rel (%p112) target = $region12
    $region11: #{ce_loss.1} parent=5 // pred_region
      %s116 = ssub.s32 %s8, 1
    $region12: #{ce_loss.1} parent=5 // pred_fallthru
      _
    %p117 = scmp.lt.s32.totalorder %s8, 2
    // Predicated region
    $region13: #{ce_loss.1} parent=5 // pred_check
      %p118 = pneg %p117
    $region14: #{ce_loss.1} parent=5 // pred_check_branch
      %120 = sbr.rel (%p118) target = $region16
    $region15: #{ce_loss.1} parent=5 // pred_region
      // Predicated region
      $region17: #{ce_loss.1} parent=15 // pred_check
        %p121 = pneg %p42
      $region18: #{ce_loss.1} parent=15 // pred_check_branch
        %123 = sbr.rel (%p121) target = $region20
      $region19: #{ce_loss.1} parent=15 // pred_region
        %s124 = smul.u32 2, %s16
        %p125 = scmp.lt.s32.totalorder %s15, 1
        %s126 = scalar_select %p125, %s15, 1
        %p127 = scmp.lt.s32.totalorder %s124, 1
        %s128 = scalar_select %p127, %s124, 1
        %s129 = smul.addr %s126, 2
        %s130 = sadd.s32 %s128, %s129
        %s131 = smul.addr %s130, 4
        %s132 = scalar_lea.vmem %s0, %s131
        %s133 = smul.u32 2, %s16
      $region20: #{ce_loss.1} parent=15 // pred_fallthru
        _
      // Predicated region
      $region21: #{ce_loss.1} parent=15 // pred_check
        %p134 = pneg %p70
      $region22: #{ce_loss.1} parent=15 // pred_check_branch
        %136 = sbr.rel (%p134) target = $region24
      $region23: #{ce_loss.1} parent=15 // pred_region
        %s137 = smul.u32 2, %s16
        %p138 = scmp.lt.s32.totalorder %s15, 1
        %s139 = scalar_select %p138, %s15, 1
        %p140 = scmp.lt.s32.totalorder %s137, 1
        %s141 = scalar_select %p140, %s137, 1
        %s142 = smul.addr %s139, 2
        %s143 = sadd.s32 %s141, %s142
        %s144 = scalar_lea.vmem %s1, %s143
        %s145 = smul.u32 2, %s16
      $region24: #{ce_loss.1} parent=15 // pred_fallthru
        _
    $region16: #{ce_loss.1} parent=5 // pred_fallthru
      _
    %p146 = scmp.le.s32.totalorder 1, %s8
    %p147 = scmp.lt.s32.totalorder %s8, 3
    %p148 = pnand %p146, %p147
    %p149 = pneg %p148
    // Predicated region
    $region25: #{ce_loss.1} parent=5 // pred_check
      _
    $region26: #{ce_loss.1} parent=5 // pred_check_branch
      %151 = sbr.rel (%p148) target = $region28
    $region27: #{ce_loss.1} parent=5 // pred_region
      %s152 = ssub.s32 %s8, 1
      %s153 = smul.u32 2, %s18
      %p154 = scmp.lt.s32.totalorder %s17, 1
      %s155 = scalar_select %p154, %s17, 1
      %p156 = scmp.lt.s32.totalorder %s153, 1
      %s157 = scalar_select %p156, %s153, 1
      %s158 = smul.addr %s155, 2
      %s159 = sadd.s32 %s157, %s158
      %s160 = smul.addr %s159, 4
      %s161 = scalar_lea.vmem %s0, %s160
      %p162 = pneg %p48
      %p163 = pneg %p45
      %s164 = smul.u32 2, %s18
      %p165 = scmp.lt.s32.totalorder %s17, 1
      %s166 = scalar_select %p165, %s17, 1
      %p167 = scmp.lt.s32.totalorder %s164, 1
      %s168 = scalar_select %p167, %s164, 1
      %s169 = smul.addr %s166, 2
      %s170 = sadd.s32 %s168, %s169
      %s171 = scalar_lea.vmem %s1, %s170
      %p172 = pneg %p76
      %p173 = pneg %p73
      %p174 = pneg %p102
      %p175 = pneg %p99
      %p176 = scmp.lt.s32.totalorder %s17, 1
      %s177 = scalar_select %p176, %s17, 1
      %s178 = scalar_lea.vmem %s2, %s177
      %s179 = smul.u32 2, %s18
      %p180 = scmp.lt.s32.totalorder %s17, 1
      %s181 = scalar_select %p180, %s17, 1
      %p182 = scmp.lt.s32.totalorder %s179, 1
      %s183 = scalar_select %p182, %s179, 1
      %s184 = smul.addr %s181, 2
      %s185 = sadd.s32 %s183, %s184
      %s186 = smul.addr %s185, 4
      %s187 = scalar_lea.vmem %s0, %s186
      %s188 = smul.u32 2, %s18
      %s189 = smul.u32 2, %s18
      %p190 = scmp.lt.s32.totalorder %s17, 1
      %s191 = scalar_select %p190, %s17, 1
      %p192 = scmp.lt.s32.totalorder %s189, 1
      %s193 = scalar_select %p192, %s189, 1
      %s194 = smul.addr %s191, 2
      %s195 = sadd.s32 %s193, %s194
      %s196 = scalar_lea.vmem %s1, %s195
      %s197 = smul.u32 2, %s18
      %p198 = scmp.lt.s32.totalorder %s17, 1
      %s199 = scalar_select %p198, %s17, 1
      %s200 = scalar_lea.vmem %s2, %s199
      %p201 = scmp.eq.s32.totalorder %s18, 0
      // Predicated region
      $region29: #{ce_loss.1} parent=27 // pred_check
        %p202 = pneg %p201
      $region30: #{ce_loss.1} parent=27 // pred_check_branch
        %204 = sbr.rel (%p202) target = $region32
      $region31: #{ce_loss.1} parent=27 // pred_region
        %v205 = vlaneseq
        %vm206 = vcmp.ge.s32.totalorder %v205, 0
        %vm207 = vcmp.lt.s32.totalorder %v205, 256
        %vm208 = vmand %vm206, %vm207
        %209 = vst.msk [vmem:[#allocation2] sm:$0x3] %vm208, 0.0
      $region32: #{ce_loss.1} parent=27 // pred_fallthru
        _
      %v210 = vld [vmem:[%s187] sm:$0xff]
      %v211 = vld [vmem:[%s196] sm:$0x3]
      %v213 = vcombine.high %v210, %v210
      %vm215 = vcmask 1043456
      %v216 = vsel %vm215, %v210, -inf
      %v217 = vrot.slane %v216, 4
      %v218 = vmax.f32 %v216, %v217
      %v219 = vrot.slane %v218, 2
      %v220 = vmax.f32 %v218, %v219
      %v221 = vrot.slane %v220, 1
      %v222 = vmax.f32 %v220, %v221
      %v223 = vsel %vm215, %v213, -inf
      %v224 = vrot.slane %v223, 4
      %v225 = vmax.f32 %v223, %v224
      %v226 = vrot.slane %v225, 2
      %v227 = vmax.f32 %v225, %v226
      %v228 = vrot.slane %v227, 1
      %v229 = vmax.f32 %v227, %v228
      %v232 = vcombine.low %v222, %v229
      %v234 = vsub.f32 %v210, %v232
      %v235 = vmul.f32 %v234, 1.442695
      %v236 = vpow.pop %v235
      %v238 = vcombine.high %v236, %v236
      %v240 = vsel %vm215, %v236, 0.0
      %v241 = vrot.slane %v240, 4
      %v242 = vadd.f32 %v240, %v241
      %v243 = vrot.slane %v242, 2
      %v244 = vadd.f32 %v242, %v243
      %v245 = vrot.slane %v244, 1
      %v246 = vadd.f32 %v244, %v245
      %v247 = vsel %vm215, %v238, 0.0
      %v248 = vrot.slane %v247, 4
      %v249 = vadd.f32 %v247, %v248
      %v250 = vrot.slane %v249, 2
      %v251 = vadd.f32 %v249, %v250
      %v252 = vrot.slane %v251, 1
      %v253 = vadd.f32 %v251, %v252
      %v254 = vrcp.pop %v246
      %v255 = vmul.f32 1.0, %v254
      %v256 = vrcp.pop %v253
      %v257 = vmul.f32 1.0, %v256
      %v260 = vcombine.low %v255, %v257
      %v262 = vmul.f32 %v236, %v260
      %v263 = vmul.f32 %v262, 1.442695
      %v264 = vpow.pop %v263
      %v266 = vcombine.high %v264, %v264
      %v268 = vsel %vm215, %v264, 0.0
      %v269 = vrot.slane %v268, 4
      %v270 = vadd.f32 %v268, %v269
      %v271 = vrot.slane %v270, 2
      %v272 = vadd.f32 %v270, %v271
      %v273 = vrot.slane %v272, 1
      %v274 = vadd.f32 %v272, %v273
      %v275 = vsel %vm215, %v266, 0.0
      %v276 = vrot.slane %v275, 4
      %v277 = vadd.f32 %v275, %v276
      %v278 = vrot.slane %v277, 2
      %v279 = vadd.f32 %v277, %v278
      %v280 = vrot.slane %v279, 1
      %v281 = vadd.f32 %v279, %v280
      %v282 = vlog2.pop %v274
      %v283 = vmul.f32 %v282, 0.6931472
      %v284 = vlog2.pop %v281
      %v285 = vmul.f32 %v284, 0.6931472
      %v286 = vlaneseq
      %v287 = vshrl.u32 %v286, 7
      %v288 = vlaneseq
      %v289 = vshrl.u32 %v288, 7
      %v290 = vsub.s32 0, %v289
      %v291 = vrot.slane %v211, %v290
      %v292 = vlaneseq
      %v293 = vshrl.u32 %v292, 7
      %v294 = vsub.s32 1, %v293
      %v295 = vrot.slane %v211, %v294
      %vm296 = vcmp.eq.s32.totalorder %v287, %v291
      %vm297 = vcmp.eq.s32.totalorder %v287, %v295
      %v299 = vcombine.high %v262, %v262
      %v301 = vsel %vm296, %v262, 0.0
      %v302 = vsel %vm297, %v299, 0.0
      %v303 = vsel %vm215, %v301, 0.0
      %v304 = vrot.slane %v303, 4
      %v305 = vadd.f32 %v303, %v304
      %v306 = vrot.slane %v305, 2
      %v307 = vadd.f32 %v305, %v306
      %v308 = vrot.slane %v307, 1
      %v309 = vadd.f32 %v307, %v308
      %v310 = vsel %vm215, %v302, 0.0
      %v311 = vrot.slane %v310, 4
      %v312 = vadd.f32 %v310, %v311
      %v313 = vrot.slane %v312, 2
      %v314 = vadd.f32 %v312, %v313
      %v315 = vrot.slane %v314, 1
      %v316 = vadd.f32 %v314, %v315
      %v317 = vsub.f32 %v283, %v309
      %v318 = vsub.f32 %v285, %v316
      %v319 = vld [vmem:[#allocation2] sm:$0x3]
      %v322 = vcombine.low %v317, %v318
      %v324 = vunpack.c.l.s4 1966171168
      %v325 = vunpack.c.0.s8 %v324
      %v326 = vlaneseq
      %v327 = vshrl.u32 %v326, 7
      %v328 = vsub.s32 %v325, %v327
      %v329 = vrot.slane %v322, %v328
      %v331 = vunpack.c.l.s4 1966171168
      %v332 = vunpack.c.0.s8 %v331
      %v333 = vlaneseq
      %v334 = vshrl.u32 %v333, 7
      %v335 = vsub.s32 %v332, %v334
      %v336 = vrot.slane %v329, %v335
      %v338 = vadd.f32 %v319, %v336
      %v339 = vlaneseq
      %vm340 = vcmp.ge.s32.totalorder %v339, 0
      %vm341 = vcmp.lt.s32.totalorder %v339, 256
      %vm342 = vmand %vm340, %vm341
      %343 = vst.msk [vmem:[#allocation2] sm:$0x3] %vm342, %v338
      // Predicated region
      $region33: #{ce_loss.1} parent=27 // pred_check
        %p344 = pneg %p201
      $region34: #{ce_loss.1} parent=27 // pred_check_branch
        %346 = sbr.rel (%p344) target = $region36
      $region35: #{ce_loss.1} parent=27 // pred_region
        %v347 = vld [vmem:[#allocation2] sm:$0x3]
        %v349 = vlaneseq
        %v350 = vshrl.u32 %v349, 7
        %v351 = vsub.s32 0, %v350
        %v352 = vrot.slane %v347, %v351
        %v353 = vlaneseq
        %v354 = vshrl.u32 %v353, 7
        %v355 = vsub.s32 1, %v354
        %v356 = vrot.slane %v347, %v355
        %vm359 = vcmask 1040384
        %v360 = vsel %vm359, %v352, 0.0
        %v361 = vsel %vm359, %v356, 0.0
        %v362 = vadd.f32 %v360, %v361
        %363 = vadd.xlane.f32.xlu0 %v362
        %v364 = vpop.xlane.xlu0 %363
        %v365 = vrot.slane %v364, 4
        %v366 = vadd.f32 %v364, %v365
        %v367 = vrot.slane %v366, 2
        %v368 = vadd.f32 %v366, %v367
        %v369 = vrot.slane %v368, 1
        %v370 = vadd.f32 %v368, %v369
        %s371 = vtos %v370
        %v372 = vstv %s371
        %vm373 = vcmask 0
        %374 = vst.msk [vmem:[%s200] sm:$0x1] %vm373, %v372
      $region36: #{ce_loss.1} parent=27 // pred_fallthru
        _
      %p375 = scmp.lt.s32.totalorder %s17, 1
      %s376 = scalar_select %p375, %s17, 1
      %s377 = scalar_lea.vmem %s2, %s376
      // Predicated region
      $region37: #{ce_loss.1} parent=27 // pred_check
        %p378 = pneg %p99
      $region38: #{ce_loss.1} parent=27 // pred_check_branch
        %380 = sbr.rel (%p378) target = $region40
      $region39: #{ce_loss.1} parent=27 // pred_region
        _
      $region40: #{ce_loss.1} parent=27 // pred_fallthru
        _
    $region28: #{ce_loss.1} parent=5 // pred_fallthru
      _
    %p381 = scmp.le.s32.totalorder 2, %s8
    // Predicated region
    $region41: #{ce_loss.1} parent=5 // pred_check
      %p382 = pneg %p381
    $region42: #{ce_loss.1} parent=5 // pred_check_branch
      %384 = sbr.rel (%p382) target = $region44
    $region43: #{ce_loss.1} parent=5 // pred_region
      %s385 = ssub.s32 %s8, 2
      // Predicated region
      $region45: #{ce_loss.1} parent=43 // pred_check
        %p386 = pneg %p105
      $region46: #{ce_loss.1} parent=43 // pred_check_branch
        %388 = sbr.rel (%p386) target = $region48
      $region47: #{ce_loss.1} parent=43 // pred_region
        %p389 = scmp.lt.s32.totalorder %s19, 1
        %s390 = scalar_select %p389, %s19, 1
        %s391 = scalar_lea.vmem %s2, %s390
      $region48: #{ce_loss.1} parent=43 // pred_fallthru
        _
    $region44: #{ce_loss.1} parent=5 // pred_fallthru
      _
  $region6: #{ce_loss.1} parent=0 // loop_footer
    %s12 = sadd.s32 1, %s8
  $region7: #{ce_loss.1} parent=0 // loop_footer_branch
    %7 = sbr.rel target = $region3
  $region8: #{ce_loss.1} parent=0 // loop_exit
    _

</llo_original>
